<compile_context>
chip_gen: v6e
topology: v6e:2x2x1
jax: 0.10.0
libtpu: 0.0.40
codegen_flags: <defaults>
</compile_context>

<pallas_src>
import functools

import jax
import jax.numpy as jnp
from jax.experimental import pallas as pl
from jax.experimental.pallas import tpu as pltpu


def _accuracy_kernel(y_pr_ref, y_gt_ref, out_ref, acc_ref, *,
                     total_n, tile_rows, num_classes):
    i = pl.program_id(0)

    @pl.when(i == 0)
    def _init():
        acc_ref[0] = jnp.int32(0)

    logits = y_pr_ref[...]                                   # (tile_rows, C), caller dtype
    # argmax over class axis, first-occurrence tie-break (matches torch.max)
    maxv = jnp.max(logits, axis=1, keepdims=True)            # (tile_rows, 1)
    col = jax.lax.broadcasted_iota(jnp.int32, logits.shape, 1)
    predicted = jnp.min(
        jnp.where(logits == maxv, col, jnp.int32(num_classes)),
        axis=1, keepdims=True)                               # (tile_rows, 1) int32

    # Mask rows of the (possibly padded) last tile that fall outside [0, N).
    row_ids = i * tile_rows + jax.lax.broadcasted_iota(
        jnp.int32, (logits.shape[0], 1), 0)
    valid = row_ids < total_n

    match = jnp.logical_and(predicted == y_gt_ref[...], valid)
    acc_ref[0] += jnp.sum(match.astype(jnp.int32))           # exact int32 count

    @pl.when(i == pl.num_programs(0) - 1)
    def _finalize():
        out_ref[0, 0] = acc_ref[0].astype(jnp.float32) * jnp.float32(1.0 / total_n)


def _choose_tile_rows(n, c, itemsize):
    # ~4 MiB logits tile -> ~8 MiB double-buffered (+ tiny label tiles): fits
    # the default scoped VMEM on v5e (16 MiB), v6e (32 MiB) and v7x (32 MiB).
    target_bytes = 4 * 1024 * 1024
    rows = target_bytes // max(1, c * itemsize)
    rows = max(8, (rows // 8) * 8)       # keep sublane alignment
    rows = min(rows, 4096)               # bound label-tile lane padding
    if rows >= n:
        return n                         # single tile == full array (always legal)
    return int(rows)


def accuracy(y_pr, y_gt, *, tile_rows=None):
    """y_pr: (N, C) logits/scores (any float dtype); y_gt: (N,) integer labels."""
    n, c = y_pr.shape
    y_gt2 = y_gt.reshape(n, 1).astype(jnp.int32)

    if tile_rows is None:
        tile_rows = _choose_tile_rows(n, c, jnp.dtype(y_pr.dtype).itemsize)
    tile_rows = int(min(tile_rows, n))
    if tile_rows < n:
        tile_rows = max(8, (tile_rows // 8) * 8)   # (8, 128) block rule

    grid = (pl.cdiv(n, tile_rows),)
    kernel = functools.partial(_accuracy_kernel,
                               total_n=n, tile_rows=tile_rows, num_classes=c)

    out = pl.pallas_call(
        kernel,
        out_shape=jax.ShapeDtypeStruct((1, 1), jnp.float32),
        grid=grid,
        in_specs=[
            pl.BlockSpec((tile_rows, c), lambda i: (i, 0)),   # logits tile (VMEM)
            pl.BlockSpec((tile_rows, 1), lambda i: (i, 0)),   # label tile (VMEM)
        ],
        out_specs=pl.BlockSpec((1, 1), lambda i: (0, 0),
                               memory_space=pltpu.MemorySpace.SMEM),
        scratch_shapes=[pltpu.SMEM((1,), jnp.int32)],          # running correct-count
        compiler_params=pltpu.CompilerParams(
            dimension_semantics=("arbitrary",)),               # carried accumulator
    )(y_pr, y_gt2)
    return out[0, 0]


if __name__ == "__main__":
    key = jax.random.PRNGKey(0)
    k1, k2, k3, k4 = jax.random.split(key, 4)

    # Case 1: small single-tile path (batch=8, classes=32), f32 logits.
    N1, C1 = 8, 32
    y_pr1 = jax.random.normal(k1, (N1, C1), dtype=jnp.float32)
    y_gt1 = jax.random.randint(k2, (N1,), 0, C1, dtype=jnp.int32)
    acc1 = jax.block_until_ready(accuracy(y_pr1, y_gt1))
    ref1 = jnp.mean((jnp.argmax(y_pr1, axis=1) == y_gt1).astype(jnp.float32))
    assert jnp.allclose(acc1, ref1), (acc1, ref1)

    # Case 2: multi-tile path with a padded last tile, bf16 logits (no upcast).
    N2, C2 = 200, 160
    y_pr2 = jax.random.normal(k3, (N2, C2), dtype=jnp.float32).astype(jnp.bfloat16)
    y_gt2 = jax.random.randint(k4, (N2,), 0, C2, dtype=jnp.int32)
    acc2 = jax.block_until_ready(accuracy(y_pr2, y_gt2, tile_rows=64))
    ref2 = jnp.mean((jnp.argmax(y_pr2, axis=1) == y_gt2).astype(jnp.float32))
    assert jnp.allclose(acc2, ref2), (acc2, ref2)

    print("KERNEL_OK")
</pallas_src>

<mosaic_0001>
module attributes {stable_mosaic.version = 11 : i64} {
  func.func @_accuracy_kernel(%arg0: i32, %arg1: memref<8x32xf32, #tpu.memory_space<vmem>>, %arg2: memref<8x1xi32, #tpu.memory_space<vmem>>, %arg3: memref<1x1xf32, #tpu.memory_space<smem>>, %arg4: memref<1xi32, #tpu.memory_space<smem>>) attributes {dimension_semantics = [#tpu.dimension_semantics<arbitrary>], iteration_bounds = array<i64: 1>, scalar_prefetch = 0 : i64, scratch_operands = 1 : i64, tpu.core_type = #tpu.core_type<tc>, window_params = [{transform_indices = @transform_0, window_bounds = array<i64: 8, 32>}, {transform_indices = @transform_1, window_bounds = array<i64: 8, 1>}, {transform_indices = @transform_2, window_bounds = array<i64: 1, 1>}]} {
    %c0_i32 = arith.constant 0 : i32
    %0 = arith.cmpi eq, %arg0, %c0_i32 : i32
    %1 = arith.extui %0 : i1 to i32
    %c0_i32_0 = arith.constant 0 : i32
    %2 = arith.cmpi ne, %1, %c0_i32_0 : i32
    scf.if %2 {
      %c0_i32_11 = arith.constant 0 : i32
      %c0_12 = arith.constant 0 : index
      %33 = memref.load %arg4[%c0_12] : memref<1xi32, #tpu.memory_space<smem>>
      memref.store %c0_i32_11, %arg4[%c0_12] : memref<1xi32, #tpu.memory_space<smem>>
    } else {
    }
    %c0 = arith.constant 0 : index
    %c0_1 = arith.constant 0 : index
    %3 = vector.load %arg1[%c0, %c0_1] : memref<8x32xf32, #tpu.memory_space<vmem>>, vector<8x32xf32>
    %cst = arith.constant dense<0xFF800000> : vector<8xf32>
    %4 = vector.multi_reduction <maximumf>, %3, %cst [1] : vector<8x32xf32> to vector<8xf32>
    %5 = vector.shape_cast %4 : vector<8xf32> to vector<8x1xf32>
    %6 = tpu.iota {dimensions = array<i32: 1>} : vector<8x32xi32>
    %7 = vector.broadcast %5 : vector<8x1xf32> to vector<8x32xf32>
    %8 = arith.cmpf oeq, %3, %7 : vector<8x32xf32>
    %c32_i32 = arith.constant 32 : i32
    %9 = vector.broadcast %c32_i32 : i32 to vector<8x32xi32>
    %10 = arith.select %8, %6, %9 : vector<8x32xi1>, vector<8x32xi32>
    %cst_2 = arith.constant dense<2147483647> : vector<8xi32>
    %11 = vector.multi_reduction <minsi>, %10, %cst_2 [1] : vector<8x32xi32> to vector<8xi32>
    %12 = vector.shape_cast %11 : vector<8xi32> to vector<8x1xi32>
    %c8_i32 = arith.constant 8 : i32
    %13 = arith.muli %arg0, %c8_i32 : i32
    %14 = tpu.iota {dimensions = array<i32: 0>} : vector<8x1xi32>
    %15 = vector.broadcast %13 : i32 to vector<8x1xi32>
    %16 = arith.addi %15, %14 : vector<8x1xi32>
    %c8_i32_3 = arith.constant 8 : i32
    %17 = vector.broadcast %c8_i32_3 : i32 to vector<8x1xi32>
    %18 = arith.cmpi slt, %16, %17 : vector<8x1xi32>
    %c0_4 = arith.constant 0 : index
    %c0_5 = arith.constant 0 : index
    %19 = vector.load %arg2[%c0_4, %c0_5] : memref<8x1xi32, #tpu.memory_space<vmem>>, vector<8x1xi32>
    %20 = arith.cmpi eq, %12, %19 : vector<8x1xi32>
    %21 = arith.andi %20, %18 : vector<8x1xi1>
    %c0_6 = arith.constant 0 : index
    %22 = memref.load %arg4[%c0_6] : memref<1xi32, #tpu.memory_space<smem>>
    %23 = arith.extui %21 : vector<8x1xi1> to vector<8x1xi32>
    %24 = vector.shape_cast %23 : vector<8x1xi32> to vector<1x8x1xi32>
    %cst_7 = arith.constant dense<0> : vector<1xi32>
    %25 = vector.multi_reduction <add>, %24, %cst_7 [1, 2] : vector<1x8x1xi32> to vector<1xi32>
    %26 = vector.shape_cast %25 : vector<1xi32> to vector<1x1x1xi32>
    %27 = vector.extract %26[0, 0, 0] : i32 from vector<1x1x1xi32>
    %28 = arith.addi %22, %27 : i32
    %c0_8 = arith.constant 0 : index
    %29 = memref.load %arg4[%c0_8] : memref<1xi32, #tpu.memory_space<smem>>
    memref.store %28, %arg4[%c0_8] : memref<1xi32, #tpu.memory_space<smem>>
    %c0_i32_9 = arith.constant 0 : i32
    %30 = arith.cmpi eq, %arg0, %c0_i32_9 : i32
    %31 = arith.extui %30 : i1 to i32
    %c0_i32_10 = arith.constant 0 : i32
    %32 = arith.cmpi ne, %31, %c0_i32_10 : i32
    scf.if %32 {
      %c0_11 = arith.constant 0 : index
      %33 = memref.load %arg4[%c0_11] : memref<1xi32, #tpu.memory_space<smem>>
      %34 = arith.sitofp %33 : i32 to f32
      %cst_12 = arith.constant 1.250000e-01 : f32
      %35 = arith.mulf %34, %cst_12 : f32
      %c0_13 = arith.constant 0 : index
      %c0_14 = arith.constant 0 : index
      %36 = memref.load %arg3[%c0_13, %c0_14] : memref<1x1xf32, #tpu.memory_space<smem>>
      memref.store %35, %arg3[%c0_13, %c0_14] : memref<1x1xf32, #tpu.memory_space<smem>>
    } else {
    }
    return
  }
  func.func @transform_0(%arg0: i32) -> (i32, i32) {
    %c0_i32 = arith.constant 0 : i32
    %c0_i32_0 = arith.constant 0 : i32
    return %arg0, %c0_i32 : i32, i32
  }
  func.func @transform_1(%arg0: i32) -> (i32, i32) {
    %c0_i32 = arith.constant 0 : i32
    %c0_i32_0 = arith.constant 0 : i32
    return %arg0, %c0_i32 : i32, i32
  }
  func.func @transform_2(%arg0: i32) -> (i32, i32) {
    %c0_i32 = arith.constant 0 : i32
    %c0_i32_0 = arith.constant 0 : i32
    %c0_i32_1 = arith.constant 0 : i32
    return %c0_i32, %c0_i32_0 : i32, i32
  }
}

</mosaic_0001>

<llo_original>
// kernel: tpu_custom_call.1
$region0: #{tpu_custom_call.1}
  #allocation0 [shape = 'u32[]', space=smem, size = 0x4, offset = 0x4, fixed_abs, tag = 'smem constant byte address 0x4 - core index']
  #allocation1 [shape = 'u32[144,128]{1,0:T(1,128)}', space=vmem, size = 0x12000, scoped, tag = 'internal scratch']
  #allocation2 [shape = 's32[1]{0:T(128)}', space=smem, size = 0x200, scoped, tag = 'scratch operand']
  %s0 = inlined_call_operand.vmem [shape: f32[8,32], index: 0, kind: input, shape index: {}]
  %s1 = inlined_call_operand.vmem [shape: s32[8,1], index: 1, kind: input, shape index: {}]
  %s2 = inlined_call_operand.hbm [shape: f32[1,1], index: 2, kind: output, shape index: {}]
  %s3 = sld [smem:[#allocation0]]
  $region26: #{tpu_custom_call.1} parent=0
    _
  %s5 = ssub.s32 1, %s3
  %s6 = scalar_select 0, %s5, %s3
  $region1: #{tpu_custom_call.1} parent=0
    #allocation3 [shape = 'u8[512]{0}', space=smem, size = 0x200, scoped, tag = 'output window, operand 0, single buffered']
    #allocation4 [shape = 's32[1]{0}', space=sflag, size = 0x4, scoped, tag = 'scoped memory for tpu_custom_call.1']
    %7 = vsyncpa [#allocation4], 0
    // Predicated region
    $region2: #{tpu_custom_call.1} parent=1 // pred_check
      _
    $region3: #{tpu_custom_call.1} parent=1 // pred_check_branch
      %9 = sbr.rel (0) target = $region5
    $region4: #{tpu_custom_call.1} parent=1 // pred_region
      _
    $region5: #{tpu_custom_call.1} parent=1 // pred_fallthru
      _
    // Predicated region
    $region6: #{tpu_custom_call.1} parent=1 // pred_check
      _
    $region7: #{tpu_custom_call.1} parent=1 // pred_check_branch
      %11 = sbr.rel (0) target = $region9
    $region8: #{tpu_custom_call.1} parent=1 // pred_region
      _
    $region9: #{tpu_custom_call.1} parent=1 // pred_fallthru
      _
    %p12 = scmp.eq.s32.totalorder 0, 0
    // Predicated region
    $region10: #{tpu_custom_call.1} parent=1 // pred_check
      %p13 = pneg %p12
    $region11: #{tpu_custom_call.1} parent=1 // pred_check_branch
      %15 = sbr.rel (%p13) target = $region13
    $region12: #{tpu_custom_call.1} parent=1 // pred_region
      %s16 = scalar_lea.smem [#allocation2], 0
      %17 = sst [smem:[%s16]] 0
    $region13: #{tpu_custom_call.1} parent=1 // pred_fallthru
      _
    %v18 = vld [vmem:[%s0] sm:$0xff]
    %vm19 = vcmask 261120
    %v20 = vsel %vm19, %v18, -inf
    %21 = vmax.xlane.f32.xlu0 %v20
    %v22 = vpop.xlane.xlu0 %21
    %v23 = vlaneseq
    %v24 = vand.u32 %v23, 127
    %vm25 = vcmp.eq.f32.partialorder %v18, %v22
    %v26 = vsel %vm25, %v24, 32
    %v27 = vsel %vm19, %v26, 2147483647
    %v28 = vand.u32 %v27, 65535
    %v29 = vshra.s32 %v27, 16
    %v30 = vcvt.s32.f32 %v28
    %v31 = vcvt.s32.f32 %v29
    %32 = vmin.xlane.f32.xlu0 %v31
    %v33 = vpop.xlane.xlu0 %32
    %vm34 = vcmp.eq.f32.partialorder %v31, %v33
    %v35 = vsel %vm34, %v30, inf
    %36 = vmin.xlane.f32.xlu0 %v35
    %v37 = vpop.xlane.xlu0 %36
    %v38 = vcvt.f32.s32 %v37
    %v39 = vcvt.f32.s32 %v33
    %v40 = vshll.u32 %v39, 16
    %v41 = vadd.s32 %v40, %v38
    %s42 = smul.u32 0, 8
    %v43 = vlaneseq
    %v44 = vshrl.u32 %v43, 7
    %v45 = vstv %s42
    %v46 = vadd.s32 %v45, %v44
    %vm47 = vcmp.lt.s32.totalorder %v46, 8
    %v48 = vld [vmem:[%s1] sm:$0xff]
    %vm49 = vcmp.eq.s32.totalorder %v41, %v48
    %vm50 = vmand %vm49, %vm47
    %s51 = sld [smem:[#allocation2]]
    %v52 = vsel %vm50, 1, 0
    %vm53 = vcmask 7168
    %v54 = vsel %vm53, %v52, 0
    %v55 = vand.u32 %v54, 65535
    %v56 = vshrl.u32 %v54, 16
    %v57 = vcvt.s32.f32 %v55
    %v58 = vcvt.s32.f32 %v56
    %59 = vadd.xlane.f32.xlu0 %v57
    %v60 = vpop.xlane.xlu0 %59
    %61 = vadd.xlane.f32.xlu0 %v58
    %v62 = vpop.xlane.xlu0 %61
    %v63 = vcvt.f32.s32 %v60
    %v64 = vcvt.f32.s32 %v62
    %v65 = vshll.u32 %v64, 16
    %v66 = vadd.s32 %v65, %v63
    %v67 = vrot.slane %v66, 4
    %v68 = vadd.s32 %v66, %v67
    %v69 = vrot.slane %v68, 2
    %v70 = vadd.s32 %v68, %v69
    %v71 = vrot.slane %v70, 1
    %v72 = vadd.s32 %v70, %v71
    %s73 = vtos %v72
    %s74 = sadd.s32 %s51, %s73
    %s75 = scalar_lea.smem [#allocation2], 0
    %76 = sst [smem:[%s75]] %s74
    // Predicated region
    $region14: #{tpu_custom_call.1} parent=1 // pred_check
      %p77 = pneg %p12
    $region15: #{tpu_custom_call.1} parent=1 // pred_check_branch
      %79 = sbr.rel (%p77) target = $region17
    $region16: #{tpu_custom_call.1} parent=1 // pred_region
      %s80 = sld [smem:[#allocation2]]
      %s81 = scvt.s32.f32 %s80
      %s82 = smul.f32 %s81, 0.125
      %s83 = scalar_lea.smem [#allocation3], 0
      %84 = sst [smem:[%s83]] %s82
    $region17: #{tpu_custom_call.1} parent=1 // pred_fallthru
      _
    // Predicated region
    $region18: #{tpu_custom_call.1} parent=1 // pred_check
      _
    $region19: #{tpu_custom_call.1} parent=1 // pred_check_branch
      %86 = sbr.rel (0) target = $region21
    $region20: #{tpu_custom_call.1} parent=1 // pred_region
      %s88 = ssub.s32 16, 16
      %89 = vsyncadd [#allocation4], %s88
      %92 = dma.smem_to_hbm [#allocation3], 16, %s2, [#allocation4]
    $region21: #{tpu_custom_call.1} parent=1 // pred_fallthru
      _
    // Predicated region
    $region22: #{tpu_custom_call.1} parent=1 // pred_check
      _
    $region23: #{tpu_custom_call.1} parent=1 // pred_check_branch
      %94 = sbr.rel (0) target = $region25
    $region24: #{tpu_custom_call.1} parent=1 // pred_region
      %95 = dma.done [#allocation4], 16
    $region25: #{tpu_custom_call.1} parent=1 // pred_fallthru
      _
    %96 = sfence
    %97 = vsyncpa [#allocation4], 1

</llo_original>
